<compile_context>
chip_gen: v7x
topology: tpu7x:2x2x1
jax: 0.10.0
libtpu: 0.0.40
codegen_flags: <defaults>
</compile_context>

<pallas_src>
import functools

import jax
import jax.numpy as jnp
from jax.experimental import pallas as pl
from jax.experimental.pallas import tpu as pltpu


# ----------------------------- helpers --------------------------------------
def _activation(x, kind: str):
    if kind == "relu":
        return jax.nn.relu(x)
    if kind == "gelu":
        return jax.nn.gelu(x)
    if kind == "silu":
        return jax.nn.silu(x)
    if kind == "sigmoid":
        return jax.nn.sigmoid(x)
    if kind == "bilinear":          # plain bilinear GLU: no nonlinearity on gate
        return x
    raise ValueError(f"unknown activation {kind}")


def _round_up(a: int, b: int) -> int:
    return ((a + b - 1) // b) * b


def _pick_tile(total: int, target: int, align: int) -> int:
    """Largest tile <= target that divides `total` and is a multiple of `align`
    (falls back to the full extent, which is always layout-legal since the
    pre-blocked weight blocks equal their full array dims)."""
    if total <= target:
        return total
    t = (target // align) * align
    while t >= align:
        if total % t == 0:
            return t
        t -= align
    return total


# ------------------------------ Pallas kernel -------------------------------
def _grouped_glu_kernel(tile_expert_ref,   # SMEM (n_tiles,) int32 (used by index_maps only)
                        x_ref,             # (tm, H)      bf16   token-slot tile
                        rw_ref,            # (tm, 1)      f32    per-slot routing weight
                        wgu_ref,           # (2, H, td)   bf16   fused gate|up block
                        wd_ref,            # (td, H)      bf16   down-proj block
                        o_ref,             # (tm, H)      bf16   output tile
                        acc_ref,           # (tm, H)      f32    VMEM accumulator
                        *, activation_type: str):
    del tile_expert_ref  # consumed by the data-dependent index_maps
    d = pl.program_id(1)

    @pl.when(d == 0)
    def _():
        acc_ref[...] = jnp.zeros_like(acc_ref)

    x = x_ref[...]                                                       # (tm, H) bf16
    g = jnp.dot(x, wgu_ref[0], preferred_element_type=jnp.float32)      # (tm, td) f32
    u = jnp.dot(x, wgu_ref[1], preferred_element_type=jnp.float32)      # (tm, td) f32
    h = _activation(g, activation_type) * u                             # (tm, td) f32
    h = h * rw_ref[...]          # routing weight on the small intermediate (0 on padding rows)
    acc_ref[...] += jnp.dot(h.astype(x.dtype), wd_ref[...],
                            preferred_element_type=jnp.float32)

    @pl.when(d == pl.num_programs(1) - 1)
    def _():
        o_ref[...] = acc_ref[...].astype(o_ref.dtype)


# --------------------------- one-time weight prep ----------------------------
def prepare_params(params, *, lora_alpha=None, d_tile: int = 256,
                   compute_dtype=jnp.bfloat16):
    """Cast/fuse/pre-block the weights ONCE.  Cache the returned dict across
    forward calls (the per-call astype pass of v2 is removed)."""
    Wg, Wu, Wd = params["w_gate"], params["w_up"], params["w_down"]
    A, Bm = params["lora_A"], params["lora_B"]
    E, H, D = Wg.shape
    r = A.shape[1]

    td = _pick_tile(D, d_tile, 128)
    n_d = D // td

    # Pre-block so each (H, td) / (td, H) weight block is one contiguous DMA and
    # fuse gate+up into a single stream (one BlockSpec, one descriptor per step).
    Wg_b = Wg.reshape(E, H, n_d, td).transpose(0, 2, 1, 3)              # [E, n_d, H, td]
    Wu_b = Wu.reshape(E, H, n_d, td).transpose(0, 2, 1, 3)
    Wgu = jnp.stack([Wg_b, Wu_b], axis=2).reshape(E * n_d, 2, H, td).astype(compute_dtype)
    Wd_b = Wd.reshape(E, n_d, td, H).reshape(E * n_d, td, H).astype(compute_dtype)

    scaling = float(lora_alpha if lora_alpha is not None else r) / max(r, 1)

    return {
        "router": params["router"].astype(jnp.float32),                 # [H, E]
        "w_gate_up": Wgu,                                               # [E*n_d, 2, H, td]
        "w_down": Wd_b,                                                 # [E*n_d, td, H]
        "lora_A": A.astype(compute_dtype),                              # [H, r]
        "lora_B": (Bm.astype(jnp.float32) * scaling).astype(compute_dtype),  # scale folded
        "hidden_size": H, "num_experts": E, "expert_dim": D,
        "d_tile": td, "n_d": n_d, "compute_dtype": compute_dtype,
    }


# ------------------------------ forward wrapper -------------------------------
def sparse_mlp_with_lora(
    x,                        # [B, S, H]
    prepared,                 # dict from prepare_params (cached bf16 weights)
    *,
    activation_type: str = "silu",
    moe_topk: int = 1,
    lora_dropout_rate: float = 0.0,
    lora_dropout_key=None,
    token_tile: int = 256,    # tm target: 256 (v5e/v7x-safe); ~512-768 viable on v6e
    vmem_limit_bytes: int = 56 * 1024 * 1024,   # < v7x 64 MiB physical, << v5e/v6e 128 MiB
):
    B, S, H = x.shape
    assert H == prepared["hidden_size"]
    T = B * S
    xf = x.reshape(T, H)

    E = prepared["num_experts"]
    td, n_d = prepared["d_tile"], prepared["n_d"]
    compute_dtype = prepared["compute_dtype"]
    Wgu, Wd_b = prepared["w_gate_up"], prepared["w_down"]

    # ---------------- routing (softmax + top-k stays as XLA glue) ----------------
    logits = xf.astype(jnp.float32) @ prepared["router"]                # [T, E]
    probs = jax.nn.softmax(logits, axis=-1)
    top_vals, top_idx = jax.lax.top_k(probs, moe_topk)                  # [T, k]
    # Renormalize over the selected experts (matches the reference module; can only
    # NaN if every selected probability underflows to exactly 0).
    top_vals = top_vals / top_vals.sum(axis=-1, keepdims=True)

    # -------------- grouped-GEMM layout: sort token-slots by expert --------------
    k = moe_topk
    TS = T * k                                                          # token-slots
    slot_expert = top_idx.reshape(TS).astype(jnp.int32)
    slot_token = jnp.repeat(jnp.arange(T, dtype=jnp.int32), k)
    slot_weight = top_vals.reshape(TS).astype(jnp.float32)

    # tm aligned to 16 for bf16 sublane packing
    tm = min(_round_up(max(token_tile, 16), 16), _round_up(TS, 16))

    order = jnp.argsort(slot_expert)                                    # stable sort
    sort_e = slot_expert[order]
    sort_t = slot_token[order]
    sort_w = slot_weight[order]

    counts = jnp.bincount(slot_expert, length=E)                        # [E]
    padded_counts = ((counts + tm - 1) // tm) * tm                      # tile-aligned groups
    pad_start = jnp.concatenate(
        [jnp.zeros((1,), jnp.int32), jnp.cumsum(padded_counts)[:-1].astype(jnp.int32)])
    raw_start = jnp.concatenate(
        [jnp.zeros((1,), jnp.int32), jnp.cumsum(counts)[:-1].astype(jnp.int32)])
    rank_in_group = jnp.arange(TS, dtype=jnp.int32) - raw_start[sort_e]
    padded_pos = pad_start[sort_e] + rank_in_group                      # row in padded buffer

    # Static upper bound on padded rows (keeps shapes static under jit; rows past
    # the real data stay zero with zero routing weight, so they contribute nothing).
    T_pad = _round_up(TS + E * (tm - 1), tm)
    n_tiles = T_pad // tm

    x_exp = jnp.zeros((T_pad, H), compute_dtype).at[padded_pos].set(
        xf.astype(compute_dtype)[sort_t])
    rw_exp = jnp.zeros((T_pad, 1), jnp.float32).at[padded_pos].set(sort_w[:, None])
    dest = jnp.zeros((T_pad,), jnp.int32).at[padded_pos].set(sort_t)

    # tile -> expert table (scalar-prefetched to SMEM, drives the weight index_maps)
    pad_end = jnp.cumsum(padded_counts)
    tile_expert = jnp.searchsorted(
        pad_end, jnp.arange(n_tiles, dtype=jnp.int32) * tm, side="right").astype(jnp.int32)
    tile_expert = jnp.minimum(tile_expert, E - 1)       # dead tail tiles (rw == 0) clamped

    kernel = functools.partial(_grouped_glu_kernel, activation_type=activation_type)

    y_exp = pl.pallas_call(
        kernel,
        out_shape=jax.ShapeDtypeStruct((T_pad, H), compute_dtype),      # bf16 writeback
        grid_spec=pltpu.PrefetchScalarGridSpec(
            num_scalar_prefetch=1,                                      # tile_expert -> SMEM
            grid=(n_tiles, n_d),
            in_specs=[
                pl.BlockSpec((tm, H), lambda i, d, te: (i, 0)),                  # x tile
                pl.BlockSpec((tm, 1), lambda i, d, te: (i, 0)),                  # routing wts
                pl.BlockSpec((pl.Squeezed(), 2, H, td),
                             lambda i, d, te: (te[i] * n_d + d, 0, 0, 0)),       # gate|up blk
                pl.BlockSpec((pl.Squeezed(), td, H),
                             lambda i, d, te: (te[i] * n_d + d, 0, 0)),          # down blk
            ],
            out_specs=pl.BlockSpec((tm, H), lambda i, d, te: (i, 0)),
            scratch_shapes=[pltpu.VMEM((tm, H), jnp.float32)],
        ),
        compiler_params=pltpu.CompilerParams(
            # token-tile axis independent (megacore on v7x), D axis accumulates.
            dimension_semantics=("parallel", "arbitrary"),
            vmem_limit_bytes=vmem_limit_bytes,
        ),
    )(tile_expert, x_exp, rw_exp, Wgu, Wd_b)

    # -------- scatter token-slot outputs back to tokens + LoRA (XLA glue) --------
    moe = jnp.zeros((T, H), jnp.float32).at[dest].add(y_exp.astype(jnp.float32))

    # TODO(synk): LoRA kept as a plain XLA GEMM — rank ~8 uses <7% of the MXU width,
    # and keeping it out of the kernel avoids re-keying the accumulator init on a
    # data-dependent expert axis.
    x_lora = xf.astype(jnp.float32)
    if lora_dropout_rate > 0.0:
        keep = jax.random.bernoulli(lora_dropout_key, 1.0 - lora_dropout_rate, xf.shape)
        x_lora = jnp.where(keep, x_lora / (1.0 - lora_dropout_rate), 0.0)
    xa = jnp.dot(x_lora.astype(compute_dtype), prepared["lora_A"],
                 preferred_element_type=jnp.float32)
    lora = jnp.dot(xa.astype(compute_dtype), prepared["lora_B"],
                   preferred_element_type=jnp.float32)

    return (moe + lora).astype(x.dtype).reshape(B, S, H)


# --------------------------- pure-JAX reference ------------------------------
def sparse_mlp_with_lora_ref(x, params, *, activation_type, moe_topk, lora_alpha):
    B, S, H = x.shape
    T = B * S
    xf = x.reshape(T, H).astype(jnp.float32)
    Wr, Wg, Wu, Wd = (params[kk].astype(jnp.float32)
                      for kk in ("router", "w_gate", "w_up", "w_down"))
    A, Bm = params["lora_A"].astype(jnp.float32), params["lora_B"].astype(jnp.float32)
    E = Wg.shape[0]
    r = A.shape[1]
    scaling = float(lora_alpha if lora_alpha is not None else r) / max(r, 1)

    probs = jax.nn.softmax(xf @ Wr, axis=-1)
    tv, ti = jax.lax.top_k(probs, moe_topk)
    tv = tv / tv.sum(-1, keepdims=True)
    rw = jnp.zeros((T, E)).at[jnp.arange(T)[:, None], ti].set(tv)

    g = jnp.einsum("ehd,th->etd", Wg, xf)
    u = jnp.einsum("ehd,th->etd", Wu, xf)
    h = _activation(g, activation_type) * u
    ey = jnp.einsum("etd,edh->eth", h, Wd)                 # [E, T, H]
    moe = jnp.einsum("te,eth->th", rw, ey)
    lora = (xf @ A) @ Bm * scaling
    return (moe + lora).reshape(B, S, H).astype(x.dtype)


# ------------------------------ params init ----------------------------------
def init_params(key, *, hidden_size, ffh_size, num_experts, lora_rank,
                init_mean=0.0, init_std=0.02, dtype=jnp.float32):
    assert ffh_size % num_experts == 0
    D = ffh_size // num_experts
    ks = jax.random.split(key, 6)
    p = {
        "router": init_mean + init_std * jax.random.normal(ks[0], (hidden_size, num_experts), dtype),
        "w_gate": init_mean + init_std * jax.random.normal(ks[1], (num_experts, hidden_size, D), dtype),
        "w_up":   init_mean + init_std * jax.random.normal(ks[2], (num_experts, hidden_size, D), dtype),
        "w_down": init_mean + init_std * jax.random.normal(ks[3], (num_experts, D, hidden_size), dtype),
    }
    r = max(lora_rank, 1)
    if lora_rank > 0:
        p["lora_A"] = init_std * jax.random.normal(ks[4], (hidden_size, r), dtype)
        p["lora_B"] = init_std * jax.random.normal(ks[5], (r, hidden_size), dtype)
    else:
        # TODO(synk): lora_rank == 0 means no adapter; modeled as zero rank-1 matrices.
        p["lora_A"] = jnp.zeros((hidden_size, r), dtype)
        p["lora_B"] = jnp.zeros((r, hidden_size), dtype)
    return p


# --------------------------------- main ---------------------------------------
if __name__ == "__main__":
    # Small shapes consistent with the module's forward: [batch, seq, hidden]
    batch, seq, hidden = 2, 8, 32
    ffh, num_experts, moe_topk = 64, 4, 2
    lora_rank, lora_alpha = 8, 16.0
    activation_type = "silu"

    key = jax.random.PRNGKey(0)
    k_x, k_p = jax.random.split(key)
    x = jax.random.normal(k_x, (batch, seq, hidden), jnp.float32)
    params = init_params(
        k_p, hidden_size=hidden, ffh_size=ffh, num_experts=num_experts,
        lora_rank=lora_rank, init_mean=0.0, init_std=0.02,
    )

    # One-time weight preparation (cast to bf16, fuse gate+up, pre-block, fold LoRA
    # scaling).  Cache `prepared` across calls instead of re-casting every forward.
    prepared = prepare_params(params, lora_alpha=lora_alpha, d_tile=256)

    out = sparse_mlp_with_lora(
        x, prepared,
        activation_type=activation_type,
        moe_topk=moe_topk,
        lora_dropout_rate=0.0,   # eval-mode / no dropout in this demo
    )
    out = jax.block_until_ready(out)

    ref = sparse_mlp_with_lora_ref(
        x, params, activation_type=activation_type,
        moe_topk=moe_topk, lora_alpha=lora_alpha,
    )
    assert out.shape == (batch, seq, hidden)
    assert jnp.allclose(out, ref, rtol=2e-2, atol=2e-2), "mismatch vs reference"

    print("KERNEL_OK")
</pallas_src>

<mosaic_0001>
module attributes {stable_mosaic.version = 11 : i64} {
  func.func @_grouped_glu_kernel(%arg0: i32, %arg1: i32, %arg2: memref<5xi32, #tpu.memory_space<smem>>, %arg3: memref<32x32xbf16, #tpu.memory_space<vmem>>, %arg4: memref<32x1xf32, #tpu.memory_space<vmem>>, %arg5: memref<1x2x32x16xbf16, #tpu.memory_space<vmem>>, %arg6: memref<1x16x32xbf16, #tpu.memory_space<vmem>>, %arg7: memref<32x32xbf16, #tpu.memory_space<vmem>>, %arg8: memref<32x32xf32, #tpu.memory_space<vmem>>) attributes {dimension_semantics = [#tpu.dimension_semantics<parallel>, #tpu.dimension_semantics<arbitrary>], iteration_bounds = array<i64: 5, 1>, scalar_prefetch = 1 : i64, scratch_operands = 1 : i64, tpu.core_type = #tpu.core_type<tc>, window_params = [{transform_indices = @transform_0, window_bounds = array<i64: 32, 32>}, {transform_indices = @transform_1, window_bounds = array<i64: 32, 1>}, {transform_indices = @transform_2, window_bounds = array<i64: 1, 2, 32, 16>}, {transform_indices = @transform_3, window_bounds = array<i64: 1, 16, 32>}, {transform_indices = @transform_4, window_bounds = array<i64: 32, 32>}]} {
    %c0_i32 = arith.constant 0 : i32
    %0 = arith.cmpi eq, %arg1, %c0_i32 : i32
    %1 = arith.extui %0 : i1 to i32
    %c0_i32_0 = arith.constant 0 : i32
    %2 = arith.cmpi ne, %1, %c0_i32_0 : i32
    scf.if %2 {
      %cst_23 = arith.constant 0.000000e+00 : f32
      %30 = vector.broadcast %cst_23 : f32 to vector<32x32xf32>
      %c0_24 = arith.constant 0 : index
      %c0_25 = arith.constant 0 : index
      %31 = vector.load %arg8[%c0_24, %c0_25] : memref<32x32xf32, #tpu.memory_space<vmem>>, vector<32x32xf32>
      tpu.vector_store %arg8[%c0_24, %c0_25], %30 {strides = array<i32>} : memref<32x32xf32, #tpu.memory_space<vmem>>, vector<32x32xf32>,
    } else {
    }
    %c0 = arith.constant 0 : index
    %c0_1 = arith.constant 0 : index
    %3 = vector.load %arg3[%c0, %c0_1] : memref<32x32xbf16, #tpu.memory_space<vmem>>, vector<32x32xbf16>
    %c0_2 = arith.constant 0 : index
    %c0_3 = arith.constant 0 : index
    %c0_4 = arith.constant 0 : index
    %c0_5 = arith.constant 0 : index
    %4 = vector.load %arg5[%c0_2, %c0_3, %c0_4, %c0_5] : memref<1x2x32x16xbf16, #tpu.memory_space<vmem>>, vector<1x1x32x16xbf16>
    %5 = vector.shape_cast %4 : vector<1x1x32x16xbf16> to vector<32x16xbf16>
    %cst = arith.constant dense<0.000000e+00> : vector<32x16xf32>
    %6 = tpu.matmul %3, %5, %cst {dimension_numbers = #tpu.dot_dimension_numbers<[1], [0], [0], [1], [0, 0, 1, 1], [], []>} : vector<32x32xbf16>, vector<32x16xbf16>, vector<32x16xf32> -> vector<32x16xf32>
    %c0_6 = arith.constant 0 : index
    %c1 = arith.constant 1 : index
    %c0_7 = arith.constant 0 : index
    %c0_8 = arith.constant 0 : index
    %7 = vector.load %arg5[%c0_6, %c1, %c0_7, %c0_8] : memref<1x2x32x16xbf16, #tpu.memory_space<vmem>>, vector<1x1x32x16xbf16>
    %8 = vector.shape_cast %7 : vector<1x1x32x16xbf16> to vector<32x16xbf16>
    %cst_9 = arith.constant dense<0.000000e+00> : vector<32x16xf32>
    %9 = tpu.matmul %3, %8, %cst_9 {dimension_numbers = #tpu.dot_dimension_numbers<[1], [0], [0], [1], [0, 0, 1, 1], [], []>} : vector<32x32xbf16>, vector<32x16xbf16>, vector<32x16xf32> -> vector<32x16xf32>
    %10 = arith.negf %6 : vector<32x16xf32>
    %11 = math.exp %10 : vector<32x16xf32>
    %cst_10 = arith.constant 1.000000e+00 : f32
    %12 = vector.broadcast %cst_10 : f32 to vector<32x16xf32>
    %13 = arith.addf %12, %11 : vector<32x16xf32>
    %14 = arith.divf %12, %13 : vector<32x16xf32>
    %15 = arith.mulf %6, %14 : vector<32x16xf32>
    %16 = arith.mulf %15, %9 : vector<32x16xf32>
    %c0_11 = arith.constant 0 : index
    %c0_12 = arith.constant 0 : index
    %17 = vector.load %arg4[%c0_11, %c0_12] : memref<32x1xf32, #tpu.memory_space<vmem>>, vector<32x1xf32>
    %18 = vector.broadcast %17 : vector<32x1xf32> to vector<32x16xf32>
    %19 = arith.mulf %16, %18 : vector<32x16xf32>
    %c0_13 = arith.constant 0 : index
    %c0_14 = arith.constant 0 : index
    %20 = vector.load %arg8[%c0_13, %c0_14] : memref<32x32xf32, #tpu.memory_space<vmem>>, vector<32x32xf32>
    %21 = arith.truncf %19 : vector<32x16xf32> to vector<32x16xbf16>
    %c0_15 = arith.constant 0 : index
    %c0_16 = arith.constant 0 : index
    %c0_17 = arith.constant 0 : index
    %22 = vector.load %arg6[%c0_15, %c0_16, %c0_17] : memref<1x16x32xbf16, #tpu.memory_space<vmem>>, vector<1x16x32xbf16>
    %23 = vector.shape_cast %22 : vector<1x16x32xbf16> to vector<16x32xbf16>
    %cst_18 = arith.constant dense<0.000000e+00> : vector<32x32xf32>
    %24 = tpu.matmul %21, %23, %cst_18 {dimension_numbers = #tpu.dot_dimension_numbers<[1], [0], [0], [1], [0, 0, 1, 1], [], []>} : vector<32x16xbf16>, vector<16x32xbf16>, vector<32x32xf32> -> vector<32x32xf32>
    %25 = arith.addf %20, %24 : vector<32x32xf32>
    %c0_19 = arith.constant 0 : index
    %c0_20 = arith.constant 0 : index
    %26 = vector.load %arg8[%c0_19, %c0_20] : memref<32x32xf32, #tpu.memory_space<vmem>>, vector<32x32xf32>
    tpu.vector_store %arg8[%c0_19, %c0_20], %25 {strides = array<i32>} : memref<32x32xf32, #tpu.memory_space<vmem>>, vector<32x32xf32>,
    %c0_i32_21 = arith.constant 0 : i32
    %27 = arith.cmpi eq, %arg1, %c0_i32_21 : i32
    %28 = arith.extui %27 : i1 to i32
    %c0_i32_22 = arith.constant 0 : i32
    %29 = arith.cmpi ne, %28, %c0_i32_22 : i32
    scf.if %29 {
      %c0_23 = arith.constant 0 : index
      %c0_24 = arith.constant 0 : index
      %30 = vector.load %arg8[%c0_23, %c0_24] : memref<32x32xf32, #tpu.memory_space<vmem>>, vector<32x32xf32>
      %31 = arith.truncf %30 : vector<32x32xf32> to vector<32x32xbf16>
      %c0_25 = arith.constant 0 : index
      %c0_26 = arith.constant 0 : index
      %32 = vector.load %arg7[%c0_25, %c0_26] : memref<32x32xbf16, #tpu.memory_space<vmem>>, vector<32x32xbf16>
      tpu.vector_store %arg7[%c0_25, %c0_26], %31 {strides = array<i32>} : memref<32x32xbf16, #tpu.memory_space<vmem>>, vector<32x32xbf16>,
    } else {
    }
    return
  }
  func.func @transform_0(%arg0: i32, %arg1: i32, %arg2: memref<5xi32, #tpu.memory_space<smem>>) -> (i32, i32) {
    %c0_i32 = arith.constant 0 : i32
    %c0_i32_0 = arith.constant 0 : i32
    return %arg0, %c0_i32 : i32, i32
  }
  func.func @transform_1(%arg0: i32, %arg1: i32, %arg2: memref<5xi32, #tpu.memory_space<smem>>) -> (i32, i32) {
    %c0_i32 = arith.constant 0 : i32
    %c0_i32_0 = arith.constant 0 : i32
    return %arg0, %c0_i32 : i32, i32
  }
  func.func @transform_2(%arg0: i32, %arg1: i32, %arg2: memref<5xi32, #tpu.memory_space<smem>>) -> (i32, i32, i32, i32) {
    %0 = arith.index_cast %arg0 : i32 to index
    %1 = memref.load %arg2[%0] : memref<5xi32, #tpu.memory_space<smem>>
    %c1_i32 = arith.constant 1 : i32
    %2 = arith.muli %1, %c1_i32 : i32
    %3 = arith.addi %2, %arg1 : i32
    %c0_i32 = arith.constant 0 : i32
    %c0_i32_0 = arith.constant 0 : i32
    %c0_i32_1 = arith.constant 0 : i32
    %c0_i32_2 = arith.constant 0 : i32
    return %3, %c0_i32, %c0_i32_0, %c0_i32_1 : i32, i32, i32, i32
  }
  func.func @transform_3(%arg0: i32, %arg1: i32, %arg2: memref<5xi32, #tpu.memory_space<smem>>) -> (i32, i32, i32) {
    %0 = arith.index_cast %arg0 : i32 to index
    %1 = memref.load %arg2[%0] : memref<5xi32, #tpu.memory_space<smem>>
    %c1_i32 = arith.constant 1 : i32
    %2 = arith.muli %1, %c1_i32 : i32
    %3 = arith.addi %2, %arg1 : i32
    %c0_i32 = arith.constant 0 : i32
    %c0_i32_0 = arith.constant 0 : i32
    %c0_i32_1 = arith.constant 0 : i32
    return %3, %c0_i32, %c0_i32_0 : i32, i32, i32
  }
  func.func @transform_4(%arg0: i32, %arg1: i32, %arg2: memref<5xi32, #tpu.memory_space<smem>>) -> (i32, i32) {
    %c0_i32 = arith.constant 0 : i32
    %c0_i32_0 = arith.constant 0 : i32
    return %arg0, %c0_i32 : i32, i32
  }
}

</mosaic_0001>

<llo_original>
// kernel: tpu_custom_call.1
$region0: #{tpu_custom_call.1}
  #allocation0 [shape = 'u32[]', space=smem, size = 0x4, offset = 0x4, fixed_abs, tag = 'smem constant byte address 0x4 - core index']
  #allocation1 [shape = 'u32[144,128]{1,0:T(1,128)}', space=vmem, size = 0x12000, scoped, tag = 'internal scratch']
  #allocation2 [shape = 'f32[32,32]{1,0:T(8,128)}', space=vmem, size = 0x4000, scoped, tag = 'scratch operand']
  #allocation3 [shape = 's32[1]{0}', space=sflag, size = 0x4, scoped, tag = 'scoped memory for tpu_custom_call.1']
  #allocation4 [shape = 'u8[512]{0}', space=smem, size = 0x200, scoped, tag = 'prefetched SMEM operand 0']
  %s0 = inlined_call_operand.vmem [shape: s32[5], index: 0, kind: input, shape index: {}]
  %s1 = inlined_call_operand.vmem [shape: bf16[160,32], index: 1, kind: input, shape index: {}]
  %s2 = inlined_call_operand.vmem [shape: f32[160,1], index: 2, kind: input, shape index: {}]
  %s3 = inlined_call_operand.vmem [shape: bf16[4,2,32,16], index: 3, kind: input, shape index: {}]
  %s4 = inlined_call_operand.vmem [shape: bf16[4,16,32], index: 4, kind: input, shape index: {}]
  %s5 = inlined_call_operand.vmem [shape: bf16[160,32], index: 5, kind: output, shape index: {}]
  %s6 = sld [smem:[#allocation0]]
  $region57: #{tpu_custom_call.1} parent=0
    _
  %s8 = ssub.s32 1, %s6
  %s9 = scalar_select 0, %s8, %s6
  %s10 = sshll.u32 %s0, 4
  %s11 = int_to_ptr.vmem [resolvable:$true] %s10
  %13 = dma.vmem_to_smem %s11, 16, [#allocation4], [#allocation3]
  %14 = dma.done [#allocation3], 16
  %15 = sfence
  loop: start=0, step=1, limit=7
  $region2: #{tpu_custom_call.1} parent=0 // loop_pre_header
    _
  $region3: #{tpu_custom_call.1} parent=0 // loop_header
    %s17 = sphi 0, %s21
    %p18 = scmp.ge.s32.totalorder %s17, 7
    %s24 = sphi 0, %s36
    %s25 = sphi 0, %s32
    %s26 = sphi 0, %s24
    %s27 = sphi 0, %s25
    %s28 = sphi 0, %s26
    %s29 = sphi 0, %s27
    %s39 = sphi 0, %s41
    %s42 = sphi 0, %s39
    %s43 = sphi 0, %s42
    %s59 = sphi 0, %s43
    %s65 = sphi 0, %s67
    %s68 = sphi 0, %s65
    %s69 = sphi 0, %s68
    %s85 = sphi 0, %s69
    %s95 = sphi 0, %s97
    %s98 = sphi 0, %s95
    %s99 = sphi 0, %s98
    %s115 = sphi 0, %s99
    %s125 = sphi 0, %s127
    %s128 = sphi 0, %s125
    %s129 = sphi 0, %s128
    %s145 = sphi 0, %s129
    %s151 = sphi 0, %s153
    %s154 = sphi 0, %s151
    %s155 = sphi 0, %s154
    %s171 = sphi 0, %s155
  $region4: #{tpu_custom_call.1} parent=0 // loop_header_branch
    %20 = sbr.rel (%p18) target = $region8
  $region5: #{tpu_custom_call.1} parent=0 // loop_body
    %s22 = ssub.s32 %s17, 1
    %s23 = ssub.s32 %s17, 2
    %s30 = sadd.s32 1, %s25
    %p31 = scmp.ge.s32.totalorder %s30, 1
    %s32 = scalar_select %p31, 0, %s30
    %s33 = sadd.s32 1, %s24
    %s34 = scalar_select %p31, %s33, %s24
    %p35 = scmp.ge.s32.totalorder %s34, 5
    %s36 = scalar_select %p35, 0, %s34
    %s37 = ssub.s32 %s24, %s36
    %p38 = scmp.eq.s32.totalorder %s37, 0
    %s40 = sadd.s32 %s39, 1
    %s41 = scalar_select %p38, %s39, %s40
    %p44 = pneg %p38
    %p45 = scmp.eq.s32.totalorder %s17, 4
    %p46 = por %p44, %p45
    %p47 = scmp.ne.s32.totalorder %s39, %s42
    %p48 = scmp.eq.s32.totalorder %s17, 0
    %p49 = por %p47, %p48
    %p50 = scmp.ne.s32.totalorder %s39, %s42
    %p51 = scmp.eq.s32.totalorder %s22, 4
    %p52 = por %p50, %p51
    %p53 = scmp.ne.s32.totalorder %s42, %s43
    %p54 = scmp.eq.s32.totalorder %s22, 0
    %p55 = por %p53, %p54
    %p56 = scmp.ne.s32.totalorder %s42, %s43
    %p57 = scmp.eq.s32.totalorder %s23, 4
    %p58 = por %p56, %p57
    %p60 = scmp.ne.s32.totalorder %s43, %s59
    %p61 = scmp.eq.s32.totalorder %s23, 0
    %p62 = por %p60, %p61
    %s63 = ssub.s32 %s24, %s36
    %p64 = scmp.eq.s32.totalorder %s63, 0
    %s66 = sadd.s32 %s65, 1
    %s67 = scalar_select %p64, %s65, %s66
    %p70 = pneg %p64
    %p71 = scmp.eq.s32.totalorder %s17, 4
    %p72 = por %p70, %p71
    %p73 = scmp.ne.s32.totalorder %s65, %s68
    %p74 = scmp.eq.s32.totalorder %s17, 0
    %p75 = por %p73, %p74
    %p76 = scmp.ne.s32.totalorder %s65, %s68
    %p77 = scmp.eq.s32.totalorder %s22, 4
    %p78 = por %p76, %p77
    %p79 = scmp.ne.s32.totalorder %s68, %s69
    %p80 = scmp.eq.s32.totalorder %s22, 0
    %p81 = por %p79, %p80
    %p82 = scmp.ne.s32.totalorder %s68, %s69
    %p83 = scmp.eq.s32.totalorder %s23, 4
    %p84 = por %p82, %p83
    %p86 = scmp.ne.s32.totalorder %s69, %s85
    %p87 = scmp.eq.s32.totalorder %s23, 0
    %p88 = por %p86, %p87
    %s89 = sld [smem:[#allocation4 + %s24]]
    %s90 = sadd.s32 %s89, %s25
    %s91 = sld [smem:[#allocation4 + %s36]]
    %s92 = sadd.s32 %s91, %s32
    %s93 = ssub.s32 %s90, %s92
    %p94 = scmp.eq.s32.totalorder %s93, 0
    %s96 = sadd.s32 %s95, 1
    %s97 = scalar_select %p94, %s95, %s96
    %p100 = pneg %p94
    %p101 = scmp.eq.s32.totalorder %s17, 4
    %p102 = por %p100, %p101
    %p103 = scmp.ne.s32.totalorder %s95, %s98
    %p104 = scmp.eq.s32.totalorder %s17, 0
    %p105 = por %p103, %p104
    %p106 = scmp.ne.s32.totalorder %s95, %s98
    %p107 = scmp.eq.s32.totalorder %s22, 4
    %p108 = por %p106, %p107
    %p109 = scmp.ne.s32.totalorder %s98, %s99
    %p110 = scmp.eq.s32.totalorder %s22, 0
    %p111 = por %p109, %p110
    %p112 = scmp.ne.s32.totalorder %s98, %s99
    %p113 = scmp.eq.s32.totalorder %s23, 4
    %p114 = por %p112, %p113
    %p116 = scmp.ne.s32.totalorder %s99, %s115
    %p117 = scmp.eq.s32.totalorder %s23, 0
    %p118 = por %p116, %p117
    %s119 = sld [smem:[#allocation4 + %s24]]
    %s120 = sadd.s32 %s119, %s25
    %s121 = sld [smem:[#allocation4 + %s36]]
    %s122 = sadd.s32 %s121, %s32
    %s123 = ssub.s32 %s120, %s122
    %p124 = scmp.eq.s32.totalorder %s123, 0
    %s126 = sadd.s32 %s125, 1
    %s127 = scalar_select %p124, %s125, %s126
    %p130 = pneg %p124
    %p131 = scmp.eq.s32.totalorder %s17, 4
    %p132 = por %p130, %p131
    %p133 = scmp.ne.s32.totalorder %s125, %s128
    %p134 = scmp.eq.s32.totalorder %s17, 0
    %p135 = por %p133, %p134
    %p136 = scmp.ne.s32.totalorder %s125, %s128
    %p137 = scmp.eq.s32.totalorder %s22, 4
    %p138 = por %p136, %p137
    %p139 = scmp.ne.s32.totalorder %s128, %s129
    %p140 = scmp.eq.s32.totalorder %s22, 0
    %p141 = por %p139, %p140
    %p142 = scmp.ne.s32.totalorder %s128, %s129
    %p143 = scmp.eq.s32.totalorder %s23, 4
    %p144 = por %p142, %p143
    %p146 = scmp.ne.s32.totalorder %s129, %s145
    %p147 = scmp.eq.s32.totalorder %s23, 0
    %p148 = por %p146, %p147
    %s149 = ssub.s32 %s24, %s36
    %p150 = scmp.eq.s32.totalorder %s149, 0
    %s152 = sadd.s32 %s151, 1
    %s153 = scalar_select %p150, %s151, %s152
    %p156 = pneg %p150
    %p157 = scmp.eq.s32.totalorder %s17, 4
    %p158 = por %p156, %p157
    %p159 = scmp.ne.s32.totalorder %s151, %s154
    %p160 = scmp.eq.s32.totalorder %s17, 0
    %p161 = por %p159, %p160
    %p162 = scmp.ne.s32.totalorder %s151, %s154
    %p163 = scmp.eq.s32.totalorder %s22, 4
    %p164 = por %p162, %p163
    %p165 = scmp.ne.s32.totalorder %s154, %s155
    %p166 = scmp.eq.s32.totalorder %s22, 0
    %p167 = por %p165, %p166
    %p168 = scmp.ne.s32.totalorder %s154, %s155
    %p169 = scmp.eq.s32.totalorder %s23, 4
    %p170 = por %p168, %p169
    %p172 = scmp.ne.s32.totalorder %s155, %s171
    %p173 = scmp.eq.s32.totalorder %s23, 0
    %p174 = por %p172, %p173
    %p175 = scmp.le.s32.totalorder 1, %s17
    %p176 = scmp.lt.s32.totalorder %s17, 6
    %p177 = pnand %p175, %p176
    %p178 = pneg %p177
    // Predicated region
    $region9: #{tpu_custom_call.1} parent=5 // pred_check
      _
    $region10: #{tpu_custom_call.1} parent=5 // pred_check_branch
      %180 = sbr.rel (%p177) target = $region12
    $region11: #{tpu_custom_call.1} parent=5 // pred_region
      %s181 = ssub.s32 %s17, 1
    $region12: #{tpu_custom_call.1} parent=5 // pred_fallthru
      _
    %p182 = scmp.lt.s32.totalorder %s17, 5
    // Predicated region
    $region13: #{tpu_custom_call.1} parent=5 // pred_check
      %p183 = pneg %p182
    $region14: #{tpu_custom_call.1} parent=5 // pred_check_branch
      %185 = sbr.rel (%p183) target = $region16
    $region15: #{tpu_custom_call.1} parent=5 // pred_region
      // Predicated region
      $region17: #{tpu_custom_call.1} parent=15 // pred_check
        %p186 = pneg %p49
      $region18: #{tpu_custom_call.1} parent=15 // pred_check_branch
        %188 = sbr.rel (%p186) target = $region20
      $region19: #{tpu_custom_call.1} parent=15 // pred_region
        %s189 = smul.u32 4, %s24
        %p190 = scmp.lt.s32.totalorder %s189, 19
        %s191 = scalar_select %p190, %s189, 19
        %s192 = smul.addr %s191, 4
        %s193 = scalar_lea.vmem %s1, %s192
        %s194 = smul.u32 4, %s24
      $region20: #{tpu_custom_call.1} parent=15 // pred_fallthru
        _
      // Predicated region
      $region21: #{tpu_custom_call.1} parent=15 // pred_check
        %p195 = pneg %p75
      $region22: #{tpu_custom_call.1} parent=15 // pred_check_branch
        %197 = sbr.rel (%p195) target = $region24
      $region23: #{tpu_custom_call.1} parent=15 // pred_region
        %s198 = smul.u32 4, %s24
        %p199 = scmp.lt.s32.totalorder %s198, 19
        %s200 = scalar_select %p199, %s198, 19
        %s201 = smul.addr %s200, 8
        %s202 = scalar_lea.vmem %s2, %s201
        %s203 = smul.u32 4, %s24
      $region24: #{tpu_custom_call.1} parent=15 // pred_fallthru
        _
      // Predicated region
      $region25: #{tpu_custom_call.1} parent=15 // pred_check
        %p204 = pneg %p105
      $region26: #{tpu_custom_call.1} parent=15 // pred_check_branch
        %206 = sbr.rel (%p204) target = $region28
      $region27: #{tpu_custom_call.1} parent=15 // pred_region
        %s207 = sld [smem:[#allocation4 + %s24]]
        %s208 = sadd.s32 %s207, %s25
        %p209 = scmp.lt.s32.totalorder %s208, 3
        %s210 = scalar_select %p209, %s208, 3
        %s211 = smul.addr %s210, 8
        %s212 = smul.addr %s211, 4
        %s213 = scalar_lea.vmem %s3, %s212
        %s214 = sld [smem:[#allocation4 + %s24]]
        %s215 = sadd.s32 %s214, %s25
      $region28: #{tpu_custom_call.1} parent=15 // pred_fallthru
        _
      // Predicated region
      $region29: #{tpu_custom_call.1} parent=15 // pred_check
        %p216 = pneg %p135
      $region30: #{tpu_custom_call.1} parent=15 // pred_check_branch
        %218 = sbr.rel (%p216) target = $region32
      $region31: #{tpu_custom_call.1} parent=15 // pred_region
        %s219 = sld [smem:[#allocation4 + %s24]]
        %s220 = sadd.s32 %s219, %s25
        %p221 = scmp.lt.s32.totalorder %s220, 3
        %s222 = scalar_select %p221, %s220, 3
        %s223 = smul.addr %s222, 2
        %s224 = smul.addr %s223, 4
        %s225 = scalar_lea.vmem %s4, %s224
        %s226 = sld [smem:[#allocation4 + %s24]]
        %s227 = sadd.s32 %s226, %s25
      $region32: #{tpu_custom_call.1} parent=15 // pred_fallthru
        _
    $region16: #{tpu_custom_call.1} parent=5 // pred_fallthru
      _
    %p228 = scmp.le.s32.totalorder 1, %s17
    %p229 = scmp.lt.s32.totalorder %s17, 6
    %p230 = pnand %p228, %p229
    %p231 = pneg %p230
    // Predicated region
    $region33: #{tpu_custom_call.1} parent=5 // pred_check
      _
    $region34: #{tpu_custom_call.1} parent=5 // pred_check_branch
      %233 = sbr.rel (%p230) target = $region36
    $region35: #{tpu_custom_call.1} parent=5 // pred_region
      %s234 = ssub.s32 %s17, 1
      %s235 = smul.u32 4, %s26
      %p236 = scmp.lt.s32.totalorder %s235, 19
      %s237 = scalar_select %p236, %s235, 19
      %s238 = smul.addr %s237, 4
      %s239 = scalar_lea.vmem %s1, %s238
      %p240 = pneg %p55
      %p241 = pneg %p52
      %s242 = smul.u32 4, %s26
      %p243 = scmp.lt.s32.totalorder %s242, 19
      %s244 = scalar_select %p243, %s242, 19
      %s245 = smul.addr %s244, 8
      %s246 = scalar_lea.vmem %s2, %s245
      %p247 = pneg %p81
      %p248 = pneg %p78
      %s249 = sld [smem:[#allocation4 + %s26]]
      %s250 = sadd.s32 %s249, %s27
      %p251 = scmp.lt.s32.totalorder %s250, 3
      %s252 = scalar_select %p251, %s250, 3
      %s253 = smul.addr %s252, 8
      %s254 = smul.addr %s253, 4
      %s255 = scalar_lea.vmem %s3, %s254
      %p256 = pneg %p111
      %p257 = pneg %p108
      %s258 = sld [smem:[#allocation4 + %s26]]
      %s259 = sadd.s32 %s258, %s27
      %p260 = scmp.lt.s32.totalorder %s259, 3
      %s261 = scalar_select %p260, %s259, 3
      %s262 = smul.addr %s261, 2
      %s263 = smul.addr %s262, 4
      %s264 = scalar_lea.vmem %s4, %s263
      %p265 = pneg %p141
      %p266 = pneg %p138
      %p267 = pneg %p167
      %p268 = pneg %p164
      %s269 = smul.u32 4, %s26
      %p270 = scmp.lt.s32.totalorder %s269, 19
      %s271 = scalar_select %p270, %s269, 19
      %s272 = smul.addr %s271, 4
      %s273 = scalar_lea.vmem %s5, %s272
      %s274 = smul.u32 4, %s26
      %p275 = scmp.lt.s32.totalorder %s274, 19
      %s276 = scalar_select %p275, %s274, 19
      %s277 = smul.addr %s276, 4
      %s278 = scalar_lea.vmem %s1, %s277
      %s279 = smul.u32 4, %s26
      %s280 = smul.u32 4, %s26
      %p281 = scmp.lt.s32.totalorder %s280, 19
      %s282 = scalar_select %p281, %s280, 19
      %s283 = smul.addr %s282, 8
      %s284 = scalar_lea.vmem %s2, %s283
      %s285 = smul.u32 4, %s26
      %s286 = sld [smem:[#allocation4 + %s26]]
      %s287 = sadd.s32 %s286, %s27
      %p288 = scmp.lt.s32.totalorder %s287, 3
      %s289 = scalar_select %p288, %s287, 3
      %s290 = smul.addr %s289, 8
      %s291 = smul.addr %s290, 4
      %s292 = scalar_lea.vmem %s3, %s291
      %s293 = sld [smem:[#allocation4 + %s26]]
      %s294 = sadd.s32 %s293, %s27
      %s295 = sld [smem:[#allocation4 + %s26]]
      %s296 = sadd.s32 %s295, %s27
      %p297 = scmp.lt.s32.totalorder %s296, 3
      %s298 = scalar_select %p297, %s296, 3
      %s299 = smul.addr %s298, 2
      %s300 = smul.addr %s299, 4
      %s301 = scalar_lea.vmem %s4, %s300
      %s302 = sld [smem:[#allocation4 + %s26]]
      %s303 = sadd.s32 %s302, %s27
      %s304 = smul.u32 4, %s26
      %p305 = scmp.lt.s32.totalorder %s304, 19
      %s306 = scalar_select %p305, %s304, 19
      %s307 = smul.addr %s306, 4
      %s308 = scalar_lea.vmem %s5, %s307
      %s309 = smul.u32 4, %s26
      %p311 = scmp.eq.s32.totalorder %s27, 0
      // Predicated region
      $region37: #{tpu_custom_call.1} parent=35 // pred_check
        %p312 = pneg %p311
      $region38: #{tpu_custom_call.1} parent=35 // pred_check_branch
        %314 = sbr.rel (%p312) target = $region40
      $region39: #{tpu_custom_call.1} parent=35 // pred_region
        %vm315 = vcmask 261120
        %316 = vst.msk [vmem:[#allocation2] sm:$0xff] %vm315, 0.0
        %317 = vst.msk [vmem:[#allocation2 + $0x8] sm:$0xff] %vm315, 0.0
        %318 = vst.msk [vmem:[#allocation2 + $0x10] sm:$0xff] %vm315, 0.0
        %319 = vst.msk [vmem:[#allocation2 + $0x18] sm:$0xff] %vm315, 0.0
      $region40: #{tpu_custom_call.1} parent=35 // pred_fallthru
        _
      %v320 = vld [vmem:[%s278] sm:$0xf]
      %v321 = vld [vmem:[%s278 + $0x4] sm:$0xf]
      %v322 = vld [vmem:[%s278 + $0x8] sm:$0xf]
      %v323 = vld [vmem:[%s278 + $0xc] sm:$0xf]
      %v324 = vld [vmem:[%s292] sm:$0xf]
      %v325 = vld [vmem:[%s292 + $0x4] sm:$0xf]
      %v326 = vld [vmem:[%s292 + $0x8] sm:$0xf]
      %v327 = vld [vmem:[%s292 + $0xc] sm:$0xf]
      %v332 = vunpack.c.l.b16 %v320
      %v333 = vunpack.c.l.b16 %v321
      %v334 = vunpack.c.l.b16 %v322
      %v335 = vunpack.c.l.b16 %v323
      %v336 = vpack.c.b16 %v333, %v332
      %v337 = vpack.c.b16 %v335, %v334
      %v342 = vunpack.c.l.b16 %v324
      %v343 = vunpack.c.l.b16 %v325
      %v344 = vunpack.c.l.b16 %v326
      %v345 = vunpack.c.l.b16 %v327
      %v346 = vpack.c.b16 %v343, %v342
      %v347 = vpack.c.b16 %v345, %v344
      %vm350 = vcmask 261120
      %v352 = vsel %vm350, %v336, 0
      %v355 = vsel %vm350, %v337, 0
      %357 = vmatprep.subr.bf16.mxu0 0
      %358 = vmatpush1.bf16.msra.mxu0 %v346
      %359 = vmatprep.subr.bf16.mxu0 0
      %360 = vmatpush1.bf16.msra.mxu0 %v347
      %361 = vmatprep.subr.bf16.mxu0 0
      %362 = vmatpush1.bf16.msra.mxu0 0
      %363 = vmatprep.subr.bf16.mxu0 0
      %364 = vmatpush1.bf16.msra.mxu0 0
      %365 = vmatprep.subr.bf16.mxu0 0
      %366 = vmatpush1.bf16.msra.mxu0 0
      %367 = vmatprep.subr.bf16.mxu0 0
      %368 = vmatpush1.bf16.msra.mxu0 0
      %369 = vmatprep.subr.bf16.mxu0 0
      %370 = vmatpush1.bf16.msra.mxu0 0
      %371 = vmatprep.subr.bf16.mxu0 0
      %372 = vmatpush1.bf16.msra.mxu0 0
      %373 = vmatprep.subr.bf16.mxu0 0
      %374 = vmatpush1.bf16.msra.mxu0 0
      %375 = vmatprep.subr.bf16.mxu0 0
      %376 = vmatpush1.bf16.msra.mxu0 0
      %377 = vmatprep.subr.bf16.mxu0 0
      %378 = vmatpush1.bf16.msra.mxu0 0
      %379 = vmatprep.subr.bf16.mxu0 0
      %380 = vmatpush1.bf16.msra.mxu0 0
      %381 = vmatprep.subr.bf16.mxu0 0
      %382 = vmatpush1.bf16.msra.mxu0 0
      %383 = vmatprep.subr.bf16.mxu0 0
      %384 = vmatpush1.bf16.msra.mxu0 0
      %385 = vmatprep.subr.bf16.mxu0 0
      %386 = vmatpush1.bf16.msra.mxu0 0
      %387 = vmatprep.subr.bf16.mxu0 0
      %388 = vmatpush1.bf16.msra.mxu0 0
      %389 = vmatprep.mubr.bf16.mxu0 0
      %390 = vmatmul.mubr.bf16.gmra.mrb[0].mxu0 %v352
      %v391 = vpop.f32.mrb[0].mxu0
      %v392 = vadd.f32 0.0, %v391
      %v393 = vpop.f32.mrb[0].mxu0
      %v394 = vpop.f32.mrb[0].mxu0
      %v395 = vadd.f32 0.0, %v394
      %v396 = vpop.f32.mrb[0].mxu0
      %397 = vmatprep.mubr.bf16.mxu0 0
      %398 = vmatmul.mubr.bf16.gmra.mrb[0].mxu0 %v355
      %v399 = vpop.f32.mrb[0].mxu0
      %v400 = vadd.f32 0.0, %v399
      %v401 = vpop.f32.mrb[0].mxu0
      %v402 = vpop.f32.mrb[0].mxu0
      %v403 = vadd.f32 0.0, %v402
      %v404 = vpop.f32.mrb[0].mxu0
      %405 = vdwg.mxu0
      %s406 = scalar_lea.vmem %s292, 16
      %v407 = vld [vmem:[%s406] sm:$0xf]
      %v408 = vld [vmem:[%s406 + $0x4] sm:$0xf]
      %v409 = vld [vmem:[%s406 + $0x8] sm:$0xf]
      %v410 = vld [vmem:[%s406 + $0xc] sm:$0xf]
      %v415 = vunpack.c.l.b16 %v407
      %v416 = vunpack.c.l.b16 %v408
      %v417 = vunpack.c.l.b16 %v409
      %v418 = vunpack.c.l.b16 %v410
      %v419 = vpack.c.b16 %v416, %v415
      %v420 = vpack.c.b16 %v418, %v417
      %423 = vmatprep.subr.bf16.mxu0 0
      %424 = vmatpush1.bf16.msra.mxu0 %v419
      %425 = vmatprep.subr.bf16.mxu0 0
      %426 = vmatpush1.bf16.msra.mxu0 %v420
      %427 = vmatprep.subr.bf16.mxu0 0
      %428 = vmatpush1.bf16.msra.mxu0 0
      %429 = vmatprep.subr.bf16.mxu0 0
      %430 = vmatpush1.bf16.msra.mxu0 0
      %431 = vmatprep.subr.bf16.mxu0 0
      %432 = vmatpush1.bf16.msra.mxu0 0
      %433 = vmatprep.subr.bf16.mxu0 0
      %434 = vmatpush1.bf16.msra.mxu0 0
      %435 = vmatprep.subr.bf16.mxu0 0
      %436 = vmatpush1.bf16.msra.mxu0 0
      %437 = vmatprep.subr.bf16.mxu0 0
      %438 = vmatpush1.bf16.msra.mxu0 0
      %439 = vmatprep.subr.bf16.mxu0 0
      %440 = vmatpush1.bf16.msra.mxu0 0
      %441 = vmatprep.subr.bf16.mxu0 0
      %442 = vmatpush1.bf16.msra.mxu0 0
      %443 = vmatprep.subr.bf16.mxu0 0
      %444 = vmatpush1.bf16.msra.mxu0 0
      %445 = vmatprep.subr.bf16.mxu0 0
      %446 = vmatpush1.bf16.msra.mxu0 0
      %447 = vmatprep.subr.bf16.mxu0 0
      %448 = vmatpush1.bf16.msra.mxu0 0
      %449 = vmatprep.subr.bf16.mxu0 0
      %450 = vmatpush1.bf16.msra.mxu0 0
      %451 = vmatprep.subr.bf16.mxu0 0
      %452 = vmatpush1.bf16.msra.mxu0 0
      %453 = vmatprep.subr.bf16.mxu0 0
      %454 = vmatpush1.bf16.msra.mxu0 0
      %455 = vmatprep.mubr.bf16.mxu0 0
      %456 = vmatmul.mubr.bf16.gmra.mrb[0].mxu0 %v352
      %v457 = vpop.f32.mrb[0].mxu0
      %v458 = vadd.f32 0.0, %v457
      %v459 = vpop.f32.mrb[0].mxu0
      %v460 = vpop.f32.mrb[0].mxu0
      %v461 = vadd.f32 0.0, %v460
      %v462 = vpop.f32.mrb[0].mxu0
      %463 = vmatprep.mubr.bf16.mxu0 0
      %464 = vmatmul.mubr.bf16.gmra.mrb[0].mxu0 %v355
      %v465 = vpop.f32.mrb[0].mxu0
      %v466 = vadd.f32 0.0, %v465
      %v467 = vpop.f32.mrb[0].mxu0
      %v468 = vpop.f32.mrb[0].mxu0
      %v469 = vadd.f32 0.0, %v468
      %v470 = vpop.f32.mrb[0].mxu0
      %471 = vdwg.mxu0
      %v472 = vxor.u32 %v392, 2147483648
      %v473 = vxor.u32 %v395, 2147483648
      %v474 = vxor.u32 %v400, 2147483648
      %v475 = vxor.u32 %v403, 2147483648
      %v476 = vmul.f32 %v472, 1.442695
      %v477 = vpow.pop %v476
      %v478 = vmul.f32 %v473, 1.442695
      %v479 = vpow.pop %v478
      %v480 = vmul.f32 %v474, 1.442695
      %v481 = vpow.pop %v480
      %v482 = vmul.f32 %v475, 1.442695
      %v483 = vpow.pop %v482
      %v484 = vadd.f32 %v477, 1.0
      %v485 = vadd.f32 %v479, 1.0
      %v486 = vadd.f32 %v481, 1.0
      %v487 = vadd.f32 %v483, 1.0
      %v488 = vrcp.pop %v484
      %v489 = vmul.f32 1.0, %v488
      %v490 = vrcp.pop %v485
      %v491 = vmul.f32 1.0, %v490
      %v492 = vrcp.pop %v486
      %v493 = vmul.f32 1.0, %v492
      %v494 = vrcp.pop %v487
      %v495 = vmul.f32 1.0, %v494
      %v496 = vmul.f32 %v392, %v489
      %v497 = vmul.f32 %v395, %v491
      %v498 = vmul.f32 %v400, %v493
      %v499 = vmul.f32 %v403, %v495
      %v500 = vmul.f32 %v496, %v458
      %v501 = vmul.f32 %v497, %v461
      %v502 = vmul.f32 %v498, %v466
      %v503 = vmul.f32 %v499, %v469
      %v504 = vld [vmem:[%s284] sm:$0xff]
      %v505 = vld [vmem:[%s284 + $0x8] sm:$0xff]
      %v506 = vld [vmem:[%s284 + $0x10] sm:$0xff]
      %v507 = vld [vmem:[%s284 + $0x18] sm:$0xff]
      %509 = vset.pattern.permute.xlu0 0
      %510 = vperm.xlu0 %509, %v504
      %v511 = vpop.permute.xlu0 %510
      %514 = vset.pattern.permute.xlu0 0
      %515 = vperm.xlu0 %514, %v505
      %v516 = vpop.permute.xlu0 %515
      %519 = vset.pattern.permute.xlu0 0
      %520 = vperm.xlu0 %519, %v506
      %v521 = vpop.permute.xlu0 %520
      %524 = vset.pattern.permute.xlu0 0
      %525 = vperm.xlu0 %524, %v507
      %v526 = vpop.permute.xlu0 %525
      %v528 = vmul.f32 %v500, %v511
      %v529 = vmul.f32 %v501, %v516
      %v530 = vmul.f32 %v502, %v521
      %v531 = vmul.f32 %v503, %v526
      %v532 = vld [vmem:[#allocation2] sm:$0xff]
      %v533 = vld [vmem:[#allocation2 + $0x8] sm:$0xff]
      %v534 = vld [vmem:[#allocation2 + $0x10] sm:$0xff]
      %v535 = vld [vmem:[#allocation2 + $0x18] sm:$0xff]
      %v536 = vpack.c.bf16 %v529, %v528
      %v537 = vpack.c.bf16 %v531, %v530
      %v538 = vld [vmem:[%s301] sm:$0xf]
      %v539 = vld [vmem:[%s301 + $0x4] sm:$0xf]
      %v542 = vunpack.c.l.b16 %v538
      %v543 = vunpack.c.l.b16 %v539
      %v544 = vpack.c.b16 %v543, %v542
      %vm546 = vcmask 130048
      %v548 = vsel %vm546, %v536, 0
      %v551 = vsel %vm546, %v537, 0
      %553 = vmatprep.subr.bf16.mxu0 0
      %554 = vmatpush1.bf16.msra.mxu0 %v544
      %555 = vmatprep.subr.bf16.mxu0 0
      %556 = vmatpush1.bf16.msra.mxu0 0
      %557 = vmatprep.subr.bf16.mxu0 0
      %558 = vmatpush1.bf16.msra.mxu0 0
      %559 = vmatprep.subr.bf16.mxu0 0
      %560 = vmatpush1.bf16.msra.mxu0 0
      %561 = vmatprep.subr.bf16.mxu0 0
      %562 = vmatpush1.bf16.msra.mxu0 0
      %563 = vmatprep.subr.bf16.mxu0 0
      %564 = vmatpush1.bf16.msra.mxu0 0
      %565 = vmatprep.subr.bf16.mxu0 0
      %566 = vmatpush1.bf16.msra.mxu0 0
      %567 = vmatprep.subr.bf16.mxu0 0
      %568 = vmatpush1.bf16.msra.mxu0 0
      %569 = vmatprep.subr.bf16.mxu0 0
      %570 = vmatpush1.bf16.msra.mxu0 0
      %571 = vmatprep.subr.bf16.mxu0 0
      %572 = vmatpush1.bf16.msra.mxu0 0
      %573 = vmatprep.subr.bf16.mxu0 0
      %574 = vmatpush1.bf16.msra.mxu0 0
      %575 = vmatprep.subr.bf16.mxu0 0
      %576 = vmatpush1.bf16.msra.mxu0 0
      %577 = vmatprep.subr.bf16.mxu0 0
      %578 = vmatpush1.bf16.msra.mxu0 0
      %579 = vmatprep.subr.bf16.mxu0 0
      %580 = vmatpush1.bf16.msra.mxu0 0
      %581 = vmatprep.subr.bf16.mxu0 0
      %582 = vmatpush1.bf16.msra.mxu0 0
      %583 = vmatprep.subr.bf16.mxu0 0
      %584 = vmatpush1.bf16.msra.mxu0 0
      %585 = vmatprep.mubr.bf16.mxu0 0
      %586 = vmatmul.mubr.bf16.gmra.mrb[0].mxu0 %v548
      %v587 = vpop.f32.mrb[0].mxu0
      %v588 = vadd.f32 0.0, %v587
      %v589 = vpop.f32.mrb[0].mxu0
      %v590 = vpop.f32.mrb[0].mxu0
      %v591 = vadd.f32 0.0, %v590
      %v592 = vpop.f32.mrb[0].mxu0
      %593 = vmatprep.mubr.bf16.mxu0 0
      %594 = vmatmul.mubr.bf16.gmra.mrb[0].mxu0 %v551
      %v595 = vpop.f32.mrb[0].mxu0
      %v596 = vadd.f32 0.0, %v595
      %v597 = vpop.f32.mrb[0].mxu0
      %v598 = vpop.f32.mrb[0].mxu0
      %v599 = vadd.f32 0.0, %v598
      %v600 = vpop.f32.mrb[0].mxu0
      %601 = vdwg.mxu0
      %v602 = vadd.f32 %v532, %v588
      %v603 = vadd.f32 %v533, %v591
      %v604 = vadd.f32 %v534, %v596
      %v605 = vadd.f32 %v535, %v599
      %606 = vst.msk [vmem:[#allocation2] sm:$0xff] %vm350, %v602
      %607 = vst.msk [vmem:[#allocation2 + $0x8] sm:$0xff] %vm350, %v603
      %608 = vst.msk [vmem:[#allocation2 + $0x10] sm:$0xff] %vm350, %v604
      %609 = vst.msk [vmem:[#allocation2 + $0x18] sm:$0xff] %vm350, %v605
      // Predicated region
      $region41: #{tpu_custom_call.1} parent=35 // pred_check
        %p610 = pneg %p311
      $region42: #{tpu_custom_call.1} parent=35 // pred_check_branch
        %612 = sbr.rel (%p610) target = $region44
      $region43: #{tpu_custom_call.1} parent=35 // pred_region
        %v613 = vld [vmem:[#allocation2] sm:$0xff]
        %v614 = vld [vmem:[#allocation2 + $0x8] sm:$0xff]
        %v615 = vld [vmem:[#allocation2 + $0x10] sm:$0xff]
        %v616 = vld [vmem:[#allocation2 + $0x18] sm:$0xff]
        %v617 = vpack.c.bf16 %v614, %v613
        %v618 = vpack.c.bf16 %v616, %v615
        %v621 = vunpack.c.l.b16 %v617
        %v622 = vunpack.c.h.b16 %v617
        %v623 = vunpack.c.l.b16 %v618
        %v624 = vunpack.c.h.b16 %v618
        %v625 = vpack.c.b16 %v621, %v621
        %v626 = vpack.c.b16 %v622, %v622
        %v627 = vpack.c.b16 %v623, %v623
        %v628 = vpack.c.b16 %v624, %v624
        %vm633 = vcmask 257024
        %634 = vst.msk [vmem:[%s308] sm:$0xf] %vm633, %v625
        %635 = vst.msk [vmem:[%s308 + $0x4] sm:$0xf] %vm633, %v626
        %636 = vst.msk [vmem:[%s308 + $0x8] sm:$0xf] %vm633, %v627
        %637 = vst.msk [vmem:[%s308 + $0xc] sm:$0xf] %vm633, %v628
      $region44: #{tpu_custom_call.1} parent=35 // pred_fallthru
        _
      %s638 = smul.u32 4, %s26
      %p639 = scmp.lt.s32.totalorder %s638, 19
      %s640 = scalar_select %p639, %s638, 19
      %s641 = smul.addr %s640, 4
      %s642 = scalar_lea.vmem %s5, %s641
      // Predicated region
      $region45: #{tpu_custom_call.1} parent=35 // pred_check
        %p643 = pneg %p164
      $region46: #{tpu_custom_call.1} parent=35 // pred_check_branch
        %645 = sbr.rel (%p643) target = $region48
      $region47: #{tpu_custom_call.1} parent=35 // pred_region
        %s646 = smul.u32 4, %s26
      $region48: #{tpu_custom_call.1} parent=35 // pred_fallthru
        _
    $region36: #{tpu_custom_call.1} parent=5 // pred_fallthru
      _
    %p647 = scmp.le.s32.totalorder 2, %s17
    // Predicated region
    $region49: #{tpu_custom_call.1} parent=5 // pred_check
      %p648 = pneg %p647
    $region50: #{tpu_custom_call.1} parent=5 // pred_check_branch
      %650 = sbr.rel (%p648) target = $region52
    $region51: #{tpu_custom_call.1} parent=5 // pred_region
      %s651 = ssub.s32 %s17, 2
      // Predicated region
      $region53: #{tpu_custom_call.1} parent=51 // pred_check
        %p652 = pneg %p170
      $region54: #{tpu_custom_call.1} parent=51 // pred_check_branch
        %654 = sbr.rel (%p652) target = $region56
      $region55: #{tpu_custom_call.1} parent=51 // pred_region
        %s655 = smul.u32 4, %s28
        %p656 = scmp.lt.s32.totalorder %s655, 19
        %s657 = scalar_select %p656, %s655, 19
        %s658 = smul.addr %s657, 4
        %s659 = scalar_lea.vmem %s5, %s658
      $region56: #{tpu_custom_call.1} parent=51 // pred_fallthru
        _
    $region52: #{tpu_custom_call.1} parent=5 // pred_fallthru
      _
  $region6: #{tpu_custom_call.1} parent=0 // loop_footer
    %s21 = sadd.s32 1, %s17
  $region7: #{tpu_custom_call.1} parent=0 // loop_footer_branch
    %16 = sbr.rel target = $region3
  $region8: #{tpu_custom_call.1} parent=0 // loop_exit
    _

</llo_original>
